<compile_context>
chip_gen: v5e
topology: v5e:2x2
jax: 0.10.0
libtpu: 0.0.40
codegen_flags: <defaults>
</compile_context>

<pallas_src>
import functools

import jax
import jax.numpy as jnp
from jax.experimental import pallas as pl
from jax.experimental.pallas import tpu as pltpu


# ----------------------------------------------------------------------------
# Kernel-side helpers
# ----------------------------------------------------------------------------
def _channel_matmul(w_t, x, use_mxu):
    """(K, C) @ (C, T) -> (K, T) with T on the lane axis."""
    if use_mxu:
        return jnp.dot(w_t, x, preferred_element_type=jnp.float32)
    # Tiny-channel VPU path: unrolled broadcast-multiply-accumulate over C.
    _, c_in = w_t.shape
    acc = w_t[:, 0:1] * x[0:1, :]
    for c in range(1, c_in):
        acc = acc + w_t[:, c:c + 1] * x[c:c + 1, :]
    return acc


def _attention_weight(att_in, w1t, b1, w2t, b2_eff, use_mxu):
    """sigmoid( local branch (1x1 -> ReLU -> 1x1, BN folded) + hoisted global
    branch folded into b2_eff ).  att_in, result: (C, T)."""
    h = jnp.maximum(_channel_matmul(w1t, att_in, use_mxu) + b1, 0.0)   # (Cr, T)
    return jax.nn.sigmoid(_channel_matmul(w2t, h, use_mxu) + b2_eff)   # (C, T)


def _stage1_kernel(use_mxu,
                   x_ref, r_ref, w1_ref, b1_ref, w2_ref, b2e_ref,
                   o_ref, psum_ref):
    x = x_ref[0].astype(jnp.float32)        # (C, T)
    r = r_ref[0].astype(jnp.float32)
    wei = _attention_weight(x + r, w1_ref[...], b1_ref[...],
                            w2_ref[...], b2e_ref[0], use_mxu)
    xi = r + wei * (x - r)                  # == x*wei + r*(1-wei), one fewer VPU op
    o_ref[0] = xi.astype(o_ref.dtype)
    # Fused stage-2 GAP: per-tile channel sums (XLU reduce is free filler in a
    # mem-bound kernel); broadcast across 128 lanes so the store is lane-dense.
    s = jnp.sum(xi, axis=-1, keepdims=True)                 # (C, 1)
    psum_ref[0] = jnp.broadcast_to(s, psum_ref.shape[1:])   # (C, 128)


def _stage2_kernel(use_mxu,
                   x_ref, r_ref, xi_ref, w1_ref, b1_ref, w2_ref, b2e_ref,
                   o_ref):
    x = x_ref[0].astype(jnp.float32)
    r = r_ref[0].astype(jnp.float32)
    xi = xi_ref[0].astype(jnp.float32)
    wei = _attention_weight(xi, w1_ref[...], b1_ref[...],
                            w2_ref[...], b2e_ref[0], use_mxu)
    o_ref[0] = (r + wei * (x - r)).astype(o_ref.dtype)


# ----------------------------------------------------------------------------
# Wrapper-side helpers (plain JAX glue)
# ----------------------------------------------------------------------------
def _fold_bn(w, b, gamma, beta, mean, var, eps=1e-5):
    """Fold eval-mode BatchNorm into a preceding 1x1 conv (channel matmul).
    w: (Cin, Cout), b: (Cout,)."""
    scale = gamma / jnp.sqrt(var + eps)
    return w * scale[None, :], (b - mean) * scale + beta


def _fold_branch(br):
    w1, b1 = _fold_bn(br["w1"], br["b1"], br["bn1_g"], br["bn1_b"],
                      br["bn1_m"], br["bn1_v"])
    w2, b2 = _fold_bn(br["w2"], br["b2"], br["bn2_g"], br["bn2_b"],
                      br["bn2_m"], br["bn2_v"])
    return w1, b1, w2, b2


def _pick_hw_tile(hw, c, itemsize, target_block_bytes=2 * 1024 * 1024):
    """hw is a multiple of 128.  Pick a multiple-of-128 divisor of hw with
    block bytes <= ~2 MiB (v7x-safe), and force >= 2 tiles per batch when
    possible so both v7x TensorCores get grid work."""
    lanes_cap = max(128, (target_block_bytes // max(c * itemsize, 1)) // 128 * 128)
    t = min(hw, lanes_cap)
    if hw >= 256:
        t = min(t, hw - 128)          # at least 2 HW tiles
    t = max(t, 128)
    while hw % t != 0:
        t -= 128
    return t


def _run_stage(kernel, streams, resident_args, b2_eff, tile_hw, *, with_psum):
    """One streaming pallas_call: `streams` are (B, C, HWp) tensors tiled over
    (B, HWp//tile_hw); folded weights stay VMEM-resident; the global-branch
    result rides along as the per-batch effective bias b2_eff (B, C, 1)."""
    B, C, HWp = streams[0].shape
    n_t = HWp // tile_hw
    w1t, b1, w2t = resident_args
    n_stream = len(streams)
    stream_dtype = streams[0].dtype

    stream_spec = pl.BlockSpec((1, C, tile_hw), lambda b, t: (b, 0, t))
    resident = lambda a: pl.BlockSpec(a.shape, lambda b, t: (0,) * a.ndim)
    b2e_spec = pl.BlockSpec((1, C, 1), lambda b, t: (b, 0, 0))

    main_shape = jax.ShapeDtypeStruct((B, C, HWp), stream_dtype)
    main_spec = pl.BlockSpec((1, C, tile_hw), lambda b, t: (b, 0, t))
    if with_psum:
        out_shape = (main_shape,
                     jax.ShapeDtypeStruct((B, C, n_t * 128), jnp.float32))
        out_specs = (main_spec,
                     pl.BlockSpec((1, C, 128), lambda b, t: (b, 0, t)))
    else:
        out_shape = main_shape
        out_specs = main_spec

    block_bytes = C * tile_hw * jnp.dtype(stream_dtype).itemsize
    # streams + main output, double-buffered, plus headroom for residents /
    # psum / b2_eff; clamp to [8 MiB, 40 MiB] (safe on v7x's 64 MiB VMEM).
    need = 2 * (n_stream + 1) * block_bytes + (2 << 20)
    vmem_limit = int(min(40 * 2 ** 20, max(8 * 2 ** 20, 2 * need)))

    return pl.pallas_call(
        kernel,
        out_shape=out_shape,
        grid_spec=pl.GridSpec(
            grid=(B, n_t),
            in_specs=[stream_spec] * n_stream
                     + [resident(w1t), resident(b1), resident(w2t), b2e_spec],
            out_specs=out_specs,
        ),
        compiler_params=pltpu.CompilerParams(
            dimension_semantics=("parallel", "parallel"),
            vmem_limit_bytes=vmem_limit,
        ),
    )(*streams, w1t, b1, w2t, b2_eff)


@functools.partial(jax.jit, static_argnames=("stream_dtype",))
def iaff_forward(x_nchw, residual_nchw, params, stream_dtype=jnp.float32):
    B, C, H, W = x_nchw.shape
    HW = H * W

    # Fold BN into all eight 1x1 convs (eval-mode running statistics).
    w1_l1, b1_l1, w2_l1, b2_l1 = _fold_branch(params["l1"])
    w1_g1, b1_g1, w2_g1, b2_g1 = _fold_branch(params["g1"])
    w1_l2, b1_l2, w2_l2, b2_l2 = _fold_branch(params["l2"])
    w1_g2, b1_g2, w2_g2, b2_g2 = _fold_branch(params["g2"])

    # Native (B, C, HW) layout -- free reshape, no transposes.
    x = x_nchw.reshape(B, C, HW).astype(stream_dtype)
    r = residual_nchw.reshape(B, C, HW).astype(stream_dtype)

    # Stage-1 GAP on the unpadded activations (matches reference mean(x + r);
    # XLA fuses this into a single read pass, no materialized x + r).
    gp1 = jnp.mean(x_nchw.reshape(B, C, HW).astype(jnp.float32)
                   + residual_nchw.reshape(B, C, HW).astype(jnp.float32), axis=2)

    # Pad H*W up to a multiple of 128 so blocks stay lane-dense and tiling is
    # never disabled; padded columns are zero (and contribute 0 to the fused
    # GAP since xi = r + wei*(x - r) = 0 there).
    HWp = ((HW + 127) // 128) * 128
    if HWp != HW:
        pad = ((0, 0), (0, 0), (0, HWp - HW))
        x = jnp.pad(x, pad)
        r = jnp.pad(r, pad)

    itemsize = jnp.dtype(stream_dtype).itemsize
    tile_hw = _pick_hw_tile(HWp, C, itemsize)
    n_t = HWp // tile_hw
    use_mxu = C >= 8   # tiny channel configs stay on the VPU MAC path

    def kernel_args(w1, b1, w2):
        # transposed weights (out, in) + column bias for the (C, T) layout
        return (jnp.transpose(w1), b1.reshape(-1, 1), jnp.transpose(w2))

    def global_att(gp, w1, b1, w2, b2):       # gp: (B, C) -> (B, C)
        h = jnp.maximum(gp @ w1 + b1, 0.0)
        return h @ w2 + b2

    # ---- stage 1: wei = sigmoid(local1(xa) + global1(xa)), xa = x + residual
    xg1 = global_att(gp1, w1_g1, b1_g1, w2_g1, b2_g1)          # (B, C)
    b2e1 = (b2_l1[None, :] + xg1)[:, :, None]                  # fold xg into bias
    xi, psum = _run_stage(functools.partial(_stage1_kernel, use_mxu),
                          (x, r), kernel_args(w1_l1, b1_l1, w2_l1),
                          b2e1, tile_hw, with_psum=True)

    # ---- stage 2: wei2 = sigmoid(local2(xi) + global2(xi))
    # GAP over xi comes from the fused per-tile partial sums -- no extra HBM
    # pass over xi.
    gp2 = psum.reshape(B, C, n_t, 128)[:, :, :, 0].sum(axis=-1) / HW
    xg2 = global_att(gp2, w1_g2, b1_g2, w2_g2, b2_g2)
    b2e2 = (b2_l2[None, :] + xg2)[:, :, None]
    xo = _run_stage(functools.partial(_stage2_kernel, use_mxu),
                    (x, r, xi), kernel_args(w1_l2, b1_l2, w2_l2),
                    b2e2, tile_hw, with_psum=False)

    return xo[:, :, :HW].reshape(B, C, H, W)


# ----------------------------------------------------------------------------
# Params + pure-JAX reference
# ----------------------------------------------------------------------------
def init_params(key, channels=4, r=4):
    inter = max(int(channels // r), 1)
    branch_keys = jax.random.split(key, 4)

    def conv_w(k, cin, cout):
        return jax.random.normal(k, (cin, cout), jnp.float32) * (1.0 / jnp.sqrt(cin))

    def make_branch(k):
        ks = jax.random.split(k, 4)
        br = {
            "w1": conv_w(ks[0], channels, inter),
            "b1": jax.random.normal(ks[1], (inter,), jnp.float32) * 0.1,
            "w2": conv_w(ks[2], inter, channels),
            "b2": jax.random.normal(ks[3], (channels,), jnp.float32) * 0.1,
        }
        # eval-mode BatchNorm with default-init running stats
        for tag, n in (("bn1", inter), ("bn2", channels)):
            br[f"{tag}_g"] = jnp.ones((n,), jnp.float32)
            br[f"{tag}_b"] = jnp.zeros((n,), jnp.float32)
            br[f"{tag}_m"] = jnp.zeros((n,), jnp.float32)
            br[f"{tag}_v"] = jnp.ones((n,), jnp.float32)
        return br

    return {name: make_branch(k)
            for name, k in zip(("l1", "g1", "l2", "g2"), branch_keys)}


def _reference(x_nchw, residual_nchw, params):
    """Pure-JAX reference for the full iAFF forward (eval mode)."""
    xt = jnp.transpose(x_nchw, (0, 2, 3, 1)).astype(jnp.float32)   # (B,H,W,C)
    rt = jnp.transpose(residual_nchw, (0, 2, 3, 1)).astype(jnp.float32)

    def ms_cam_wei(a, local, glb):
        lw1, lb1, lw2, lb2 = local
        gw1, gb1, gw2, gb2 = glb
        xl = jnp.maximum(a @ lw1 + lb1, 0.0) @ lw2 + lb2
        gp = jnp.mean(a, axis=(1, 2), keepdims=True)
        xg = jnp.maximum(gp @ gw1 + gb1, 0.0) @ gw2 + gb2
        return jax.nn.sigmoid(xl + xg)

    xa = xt + rt
    wei = ms_cam_wei(xa, _fold_branch(params["l1"]), _fold_branch(params["g1"]))
    xi = xt * wei + rt * (1.0 - wei)
    wei2 = ms_cam_wei(xi, _fold_branch(params["l2"]), _fold_branch(params["g2"]))
    xo = xt * wei2 + rt * (1.0 - wei2)
    return jnp.transpose(xo, (0, 3, 1, 2))


if __name__ == "__main__":
    key = jax.random.PRNGKey(0)
    kx, kr, kp = jax.random.split(key, 3)

    # ---- main config: channels=4, r=4 -> inter_channels=1, H*W = 256 --------
    B, C, H, W = 2, 4, 16, 16
    x = jax.random.normal(kx, (B, C, H, W), jnp.float32)
    residual = jax.random.normal(kr, (B, C, H, W), jnp.float32)
    params = init_params(kp, channels=C, r=4)

    out = jax.block_until_ready(iaff_forward(x, residual, params))
    ref = _reference(x, residual, params)
    assert out.shape == x.shape
    assert jnp.allclose(out, ref, atol=1e-5, rtol=1e-5), "mismatch vs reference"

    # ---- non-128-aligned spatial size (exercises the HW padding path) -------
    H2, W2 = 10, 10
    x2 = jax.random.normal(jax.random.PRNGKey(1), (B, C, H2, W2), jnp.float32)
    r2 = jax.random.normal(jax.random.PRNGKey(2), (B, C, H2, W2), jnp.float32)
    out2 = jax.block_until_ready(iaff_forward(x2, r2, params))
    ref2 = _reference(x2, r2, params)
    assert out2.shape == x2.shape
    assert jnp.allclose(out2, ref2, atol=1e-5, rtol=1e-5), "mismatch (padded HW)"

    # ---- bf16 streaming smoke test (halved HBM traffic on v5e/v6e) ----------
    out_bf16 = jax.block_until_ready(
        iaff_forward(x, residual, params, stream_dtype=jnp.bfloat16))
    diff = jnp.max(jnp.abs(out_bf16.astype(jnp.float32) - ref))
    assert bool(jnp.all(jnp.isfinite(out_bf16.astype(jnp.float32))))
    assert float(diff) < 0.3, f"bf16 streaming diverged: {float(diff)}"

    print("KERNEL_OK")
</pallas_src>

<mosaic_0001>
module attributes {stable_mosaic.version = 11 : i64} {
  func.func @_stage1_kernel(%arg0: i32, %arg1: i32, %arg2: memref<1x4x128xf32, #tpu.memory_space<vmem>>, %arg3: memref<1x4x128xf32, #tpu.memory_space<vmem>>, %arg4: memref<1x4xf32, #tpu.memory_space<vmem>>, %arg5: memref<1x1xf32, #tpu.memory_space<vmem>>, %arg6: memref<4x1xf32, #tpu.memory_space<vmem>>, %arg7: memref<1x4x1xf32, #tpu.memory_space<vmem>>, %arg8: memref<1x4x128xf32, #tpu.memory_space<vmem>>, %arg9: memref<1x4x128xf32, #tpu.memory_space<vmem>>) attributes {dimension_semantics = [#tpu.dimension_semantics<parallel>, #tpu.dimension_semantics<parallel>], iteration_bounds = array<i64: 2, 2>, scalar_prefetch = 0 : i64, scratch_operands = 0 : i64, tpu.core_type = #tpu.core_type<tc>, window_params = [{transform_indices = @transform_0, window_bounds = array<i64: 1, 4, 128>}, {transform_indices = @transform_1, window_bounds = array<i64: 1, 4, 128>}, {pipeline_mode = #tpu.pipeline_mode<synchronous>, transform_indices = @transform_2, window_bounds = array<i64: 1, 4>}, {pipeline_mode = #tpu.pipeline_mode<synchronous>, transform_indices = @transform_3, window_bounds = array<i64: 1, 1>}, {pipeline_mode = #tpu.pipeline_mode<synchronous>, transform_indices = @transform_4, window_bounds = array<i64: 4, 1>}, {transform_indices = @transform_5, window_bounds = array<i64: 1, 4, 1>}, {transform_indices = @transform_6, window_bounds = array<i64: 1, 4, 128>}, {transform_indices = @transform_7, window_bounds = array<i64: 1, 4, 128>}]} {
    %c0 = arith.constant 0 : index
    %c0_0 = arith.constant 0 : index
    %c0_1 = arith.constant 0 : index
    %0 = vector.load %arg2[%c0, %c0_0, %c0_1] : memref<1x4x128xf32, #tpu.memory_space<vmem>>, vector<1x4x128xf32>
    %1 = vector.shape_cast %0 : vector<1x4x128xf32> to vector<4x128xf32>
    %c0_2 = arith.constant 0 : index
    %c0_3 = arith.constant 0 : index
    %c0_4 = arith.constant 0 : index
    %2 = vector.load %arg3[%c0_2, %c0_3, %c0_4] : memref<1x4x128xf32, #tpu.memory_space<vmem>>, vector<1x4x128xf32>
    %3 = vector.shape_cast %2 : vector<1x4x128xf32> to vector<4x128xf32>
    %4 = arith.addf %1, %3 : vector<4x128xf32>
    %c0_5 = arith.constant 0 : index
    %c0_6 = arith.constant 0 : index
    %5 = vector.load %arg4[%c0_5, %c0_6] : memref<1x4xf32, #tpu.memory_space<vmem>>, vector<1x4xf32>
    %c0_7 = arith.constant 0 : index
    %c0_8 = arith.constant 0 : index
    %6 = vector.load %arg5[%c0_7, %c0_8] : memref<1x1xf32, #tpu.memory_space<vmem>>, vector<1x1xf32>
    %c0_9 = arith.constant 0 : index
    %c0_10 = arith.constant 0 : index
    %7 = vector.load %arg6[%c0_9, %c0_10] : memref<4x1xf32, #tpu.memory_space<vmem>>, vector<4x1xf32>
    %c0_11 = arith.constant 0 : index
    %c0_12 = arith.constant 0 : index
    %c0_13 = arith.constant 0 : index
    %8 = vector.load %arg7[%c0_11, %c0_12, %c0_13] : memref<1x4x1xf32, #tpu.memory_space<vmem>>, vector<1x4x1xf32>
    %9 = vector.shape_cast %8 : vector<1x4x1xf32> to vector<4x1xf32>
    %10 = vector.extract_strided_slice %5 {offsets = [0, 0], sizes = [1, 1], strides = [1, 1]} : vector<1x4xf32> to vector<1x1xf32>
    %11 = vector.extract_strided_slice %4 {offsets = [0, 0], sizes = [1, 128], strides = [1, 1]} : vector<4x128xf32> to vector<1x128xf32>
    %12 = vector.broadcast %10 : vector<1x1xf32> to vector<1x128xf32>
    %13 = arith.mulf %12, %11 : vector<1x128xf32>
    %14 = vector.extract_strided_slice %5 {offsets = [0, 1], sizes = [1, 1], strides = [1, 1]} : vector<1x4xf32> to vector<1x1xf32>
    %15 = vector.extract_strided_slice %4 {offsets = [1, 0], sizes = [1, 128], strides = [1, 1]} : vector<4x128xf32> to vector<1x128xf32>
    %16 = vector.broadcast %14 : vector<1x1xf32> to vector<1x128xf32>
    %17 = arith.mulf %16, %15 : vector<1x128xf32>
    %18 = arith.addf %13, %17 : vector<1x128xf32>
    %19 = vector.extract_strided_slice %5 {offsets = [0, 2], sizes = [1, 1], strides = [1, 1]} : vector<1x4xf32> to vector<1x1xf32>
    %20 = vector.extract_strided_slice %4 {offsets = [2, 0], sizes = [1, 128], strides = [1, 1]} : vector<4x128xf32> to vector<1x128xf32>
    %21 = vector.broadcast %19 : vector<1x1xf32> to vector<1x128xf32>
    %22 = arith.mulf %21, %20 : vector<1x128xf32>
    %23 = arith.addf %18, %22 : vector<1x128xf32>
    %24 = vector.extract_strided_slice %5 {offsets = [0, 3], sizes = [1, 1], strides = [1, 1]} : vector<1x4xf32> to vector<1x1xf32>
    %25 = vector.extract_strided_slice %4 {offsets = [3, 0], sizes = [1, 128], strides = [1, 1]} : vector<4x128xf32> to vector<1x128xf32>
    %26 = vector.broadcast %24 : vector<1x1xf32> to vector<1x128xf32>
    %27 = arith.mulf %26, %25 : vector<1x128xf32>
    %28 = arith.addf %23, %27 : vector<1x128xf32>
    %29 = vector.broadcast %6 : vector<1x1xf32> to vector<1x128xf32>
    %30 = arith.addf %28, %29 : vector<1x128xf32>
    %cst = arith.constant 0.000000e+00 : f32
    %31 = vector.broadcast %cst : f32 to vector<1x128xf32>
    %32 = arith.maximumf %30, %31 : vector<1x128xf32>
    %33 = vector.broadcast %7 : vector<4x1xf32> to vector<4x128xf32>
    %34 = vector.broadcast %32 : vector<1x128xf32> to vector<4x128xf32>
    %35 = arith.mulf %33, %34 : vector<4x128xf32>
    %36 = vector.broadcast %9 : vector<4x1xf32> to vector<4x128xf32>
    %37 = arith.addf %35, %36 : vector<4x128xf32>
    %38 = arith.negf %37 : vector<4x128xf32>
    %39 = math.exp %38 : vector<4x128xf32>
    %cst_14 = arith.constant 1.000000e+00 : f32
    %40 = vector.broadcast %cst_14 : f32 to vector<4x128xf32>
    %41 = arith.addf %40, %39 : vector<4x128xf32>
    %42 = arith.divf %40, %41 : vector<4x128xf32>
    %43 = arith.subf %1, %3 : vector<4x128xf32>
    %44 = arith.mulf %42, %43 : vector<4x128xf32>
    %45 = arith.addf %3, %44 : vector<4x128xf32>
    %c0_15 = arith.constant 0 : index
    %c0_16 = arith.constant 0 : index
    %c0_17 = arith.constant 0 : index
    %46 = vector.load %arg8[%c0_15, %c0_16, %c0_17] : memref<1x4x128xf32, #tpu.memory_space<vmem>>, vector<1x4x128xf32>
    %47 = vector.shape_cast %46 : vector<1x4x128xf32> to vector<4x128xf32>
    %48 = vector.shape_cast %45 : vector<4x128xf32> to vector<1x4x128xf32>
    tpu.vector_store %arg8[%c0_15, %c0_16, %c0_17], %48 {strides = array<i32>} : memref<1x4x128xf32, #tpu.memory_space<vmem>>, vector<1x4x128xf32>,
    %cst_18 = arith.constant dense<0.000000e+00> : vector<4xf32>
    %49 = vector.multi_reduction <add>, %45, %cst_18 [1] : vector<4x128xf32> to vector<4xf32>
    %50 = vector.shape_cast %49 : vector<4xf32> to vector<4x1xf32>
    %51 = vector.shape_cast %50 : vector<4x1xf32> to vector<4x1xf32>
    %52 = vector.broadcast %51 : vector<4x1xf32> to vector<4x128xf32>
    %c0_19 = arith.constant 0 : index
    %c0_20 = arith.constant 0 : index
    %c0_21 = arith.constant 0 : index
    %53 = vector.load %arg9[%c0_19, %c0_20, %c0_21] : memref<1x4x128xf32, #tpu.memory_space<vmem>>, vector<1x4x128xf32>
    %54 = vector.shape_cast %53 : vector<1x4x128xf32> to vector<4x128xf32>
    %55 = vector.shape_cast %52 : vector<4x128xf32> to vector<1x4x128xf32>
    tpu.vector_store %arg9[%c0_19, %c0_20, %c0_21], %55 {strides = array<i32>} : memref<1x4x128xf32, #tpu.memory_space<vmem>>, vector<1x4x128xf32>,
    return
  }
  func.func @transform_0(%arg0: i32, %arg1: i32) -> (i32, i32, i32) {
    %c0_i32 = arith.constant 0 : i32
    %c0_i32_0 = arith.constant 0 : i32
    return %arg0, %c0_i32, %arg1 : i32, i32, i32
  }
  func.func @transform_1(%arg0: i32, %arg1: i32) -> (i32, i32, i32) {
    %c0_i32 = arith.constant 0 : i32
    %c0_i32_0 = arith.constant 0 : i32
    return %arg0, %c0_i32, %arg1 : i32, i32, i32
  }
  func.func @transform_2(%arg0: i32, %arg1: i32) -> (i32, i32) {
    %c0_i32 = arith.constant 0 : i32
    %c0_i32_0 = arith.constant 0 : i32
    %c0_i32_1 = arith.constant 0 : i32
    return %c0_i32, %c0_i32_0 : i32, i32
  }
  func.func @transform_3(%arg0: i32, %arg1: i32) -> (i32, i32) {
    %c0_i32 = arith.constant 0 : i32
    %c0_i32_0 = arith.constant 0 : i32
    %c0_i32_1 = arith.constant 0 : i32
    return %c0_i32, %c0_i32_0 : i32, i32
  }
  func.func @transform_4(%arg0: i32, %arg1: i32) -> (i32, i32) {
    %c0_i32 = arith.constant 0 : i32
    %c0_i32_0 = arith.constant 0 : i32
    %c0_i32_1 = arith.constant 0 : i32
    return %c0_i32, %c0_i32_0 : i32, i32
  }
  func.func @transform_5(%arg0: i32, %arg1: i32) -> (i32, i32, i32) {
    %c0_i32 = arith.constant 0 : i32
    %c0_i32_0 = arith.constant 0 : i32
    %c0_i32_1 = arith.constant 0 : i32
    return %arg0, %c0_i32, %c0_i32_0 : i32, i32, i32
  }
  func.func @transform_6(%arg0: i32, %arg1: i32) -> (i32, i32, i32) {
    %c0_i32 = arith.constant 0 : i32
    %c0_i32_0 = arith.constant 0 : i32
    return %arg0, %c0_i32, %arg1 : i32, i32, i32
  }
  func.func @transform_7(%arg0: i32, %arg1: i32) -> (i32, i32, i32) {
    %c0_i32 = arith.constant 0 : i32
    %c0_i32_0 = arith.constant 0 : i32
    return %arg0, %c0_i32, %arg1 : i32, i32, i32
  }
}

module attributes {stable_mosaic.version = 11 : i64} {
  func.func @_stage2_kernel(%arg0: i32, %arg1: i32, %arg2: memref<1x4x128xf32, #tpu.memory_space<vmem>>, %arg3: memref<1x4x128xf32, #tpu.memory_space<vmem>>, %arg4: memref<1x4x128xf32, #tpu.memory_space<vmem>>, %arg5: memref<1x4xf32, #tpu.memory_space<vmem>>, %arg6: memref<1x1xf32, #tpu.memory_space<vmem>>, %arg7: memref<4x1xf32, #tpu.memory_space<vmem>>, %arg8: memref<1x4x1xf32, #tpu.memory_space<vmem>>, %arg9: memref<1x4x128xf32, #tpu.memory_space<vmem>>) attributes {dimension_semantics = [#tpu.dimension_semantics<parallel>, #tpu.dimension_semantics<parallel>], iteration_bounds = array<i64: 2, 2>, scalar_prefetch = 0 : i64, scratch_operands = 0 : i64, tpu.core_type = #tpu.core_type<tc>, window_params = [{transform_indices = @transform_0, window_bounds = array<i64: 1, 4, 128>}, {transform_indices = @transform_1, window_bounds = array<i64: 1, 4, 128>}, {transform_indices = @transform_2, window_bounds = array<i64: 1, 4, 128>}, {pipeline_mode = #tpu.pipeline_mode<synchronous>, transform_indices = @transform_3, window_bounds = array<i64: 1, 4>}, {pipeline_mode = #tpu.pipeline_mode<synchronous>, transform_indices = @transform_4, window_bounds = array<i64: 1, 1>}, {pipeline_mode = #tpu.pipeline_mode<synchronous>, transform_indices = @transform_5, window_bounds = array<i64: 4, 1>}, {transform_indices = @transform_6, window_bounds = array<i64: 1, 4, 1>}, {transform_indices = @transform_7, window_bounds = array<i64: 1, 4, 128>}]} {
    %c0 = arith.constant 0 : index
    %c0_0 = arith.constant 0 : index
    %c0_1 = arith.constant 0 : index
    %0 = vector.load %arg2[%c0, %c0_0, %c0_1] : memref<1x4x128xf32, #tpu.memory_space<vmem>>, vector<1x4x128xf32>
    %1 = vector.shape_cast %0 : vector<1x4x128xf32> to vector<4x128xf32>
    %c0_2 = arith.constant 0 : index
    %c0_3 = arith.constant 0 : index
    %c0_4 = arith.constant 0 : index
    %2 = vector.load %arg3[%c0_2, %c0_3, %c0_4] : memref<1x4x128xf32, #tpu.memory_space<vmem>>, vector<1x4x128xf32>
    %3 = vector.shape_cast %2 : vector<1x4x128xf32> to vector<4x128xf32>
    %c0_5 = arith.constant 0 : index
    %c0_6 = arith.constant 0 : index
    %c0_7 = arith.constant 0 : index
    %4 = vector.load %arg4[%c0_5, %c0_6, %c0_7] : memref<1x4x128xf32, #tpu.memory_space<vmem>>, vector<1x4x128xf32>
    %5 = vector.shape_cast %4 : vector<1x4x128xf32> to vector<4x128xf32>
    %c0_8 = arith.constant 0 : index
    %c0_9 = arith.constant 0 : index
    %6 = vector.load %arg5[%c0_8, %c0_9] : memref<1x4xf32, #tpu.memory_space<vmem>>, vector<1x4xf32>
    %c0_10 = arith.constant 0 : index
    %c0_11 = arith.constant 0 : index
    %7 = vector.load %arg6[%c0_10, %c0_11] : memref<1x1xf32, #tpu.memory_space<vmem>>, vector<1x1xf32>
    %c0_12 = arith.constant 0 : index
    %c0_13 = arith.constant 0 : index
    %8 = vector.load %arg7[%c0_12, %c0_13] : memref<4x1xf32, #tpu.memory_space<vmem>>, vector<4x1xf32>
    %c0_14 = arith.constant 0 : index
    %c0_15 = arith.constant 0 : index
    %c0_16 = arith.constant 0 : index
    %9 = vector.load %arg8[%c0_14, %c0_15, %c0_16] : memref<1x4x1xf32, #tpu.memory_space<vmem>>, vector<1x4x1xf32>
    %10 = vector.shape_cast %9 : vector<1x4x1xf32> to vector<4x1xf32>
    %11 = vector.extract_strided_slice %6 {offsets = [0, 0], sizes = [1, 1], strides = [1, 1]} : vector<1x4xf32> to vector<1x1xf32>
    %12 = vector.extract_strided_slice %5 {offsets = [0, 0], sizes = [1, 128], strides = [1, 1]} : vector<4x128xf32> to vector<1x128xf32>
    %13 = vector.broadcast %11 : vector<1x1xf32> to vector<1x128xf32>
    %14 = arith.mulf %13, %12 : vector<1x128xf32>
    %15 = vector.extract_strided_slice %6 {offsets = [0, 1], sizes = [1, 1], strides = [1, 1]} : vector<1x4xf32> to vector<1x1xf32>
    %16 = vector.extract_strided_slice %5 {offsets = [1, 0], sizes = [1, 128], strides = [1, 1]} : vector<4x128xf32> to vector<1x128xf32>
    %17 = vector.broadcast %15 : vector<1x1xf32> to vector<1x128xf32>
    %18 = arith.mulf %17, %16 : vector<1x128xf32>
    %19 = arith.addf %14, %18 : vector<1x128xf32>
    %20 = vector.extract_strided_slice %6 {offsets = [0, 2], sizes = [1, 1], strides = [1, 1]} : vector<1x4xf32> to vector<1x1xf32>
    %21 = vector.extract_strided_slice %5 {offsets = [2, 0], sizes = [1, 128], strides = [1, 1]} : vector<4x128xf32> to vector<1x128xf32>
    %22 = vector.broadcast %20 : vector<1x1xf32> to vector<1x128xf32>
    %23 = arith.mulf %22, %21 : vector<1x128xf32>
    %24 = arith.addf %19, %23 : vector<1x128xf32>
    %25 = vector.extract_strided_slice %6 {offsets = [0, 3], sizes = [1, 1], strides = [1, 1]} : vector<1x4xf32> to vector<1x1xf32>
    %26 = vector.extract_strided_slice %5 {offsets = [3, 0], sizes = [1, 128], strides = [1, 1]} : vector<4x128xf32> to vector<1x128xf32>
    %27 = vector.broadcast %25 : vector<1x1xf32> to vector<1x128xf32>
    %28 = arith.mulf %27, %26 : vector<1x128xf32>
    %29 = arith.addf %24, %28 : vector<1x128xf32>
    %30 = vector.broadcast %7 : vector<1x1xf32> to vector<1x128xf32>
    %31 = arith.addf %29, %30 : vector<1x128xf32>
    %cst = arith.constant 0.000000e+00 : f32
    %32 = vector.broadcast %cst : f32 to vector<1x128xf32>
    %33 = arith.maximumf %31, %32 : vector<1x128xf32>
    %34 = vector.broadcast %8 : vector<4x1xf32> to vector<4x128xf32>
    %35 = vector.broadcast %33 : vector<1x128xf32> to vector<4x128xf32>
    %36 = arith.mulf %34, %35 : vector<4x128xf32>
    %37 = vector.broadcast %10 : vector<4x1xf32> to vector<4x128xf32>
    %38 = arith.addf %36, %37 : vector<4x128xf32>
    %39 = arith.negf %38 : vector<4x128xf32>
    %40 = math.exp %39 : vector<4x128xf32>
    %cst_17 = arith.constant 1.000000e+00 : f32
    %41 = vector.broadcast %cst_17 : f32 to vector<4x128xf32>
    %42 = arith.addf %41, %40 : vector<4x128xf32>
    %43 = arith.divf %41, %42 : vector<4x128xf32>
    %44 = arith.subf %1, %3 : vector<4x128xf32>
    %45 = arith.mulf %43, %44 : vector<4x128xf32>
    %46 = arith.addf %3, %45 : vector<4x128xf32>
    %c0_18 = arith.constant 0 : index
    %c0_19 = arith.constant 0 : index
    %c0_20 = arith.constant 0 : index
    %47 = vector.load %arg9[%c0_18, %c0_19, %c0_20] : memref<1x4x128xf32, #tpu.memory_space<vmem>>, vector<1x4x128xf32>
    %48 = vector.shape_cast %47 : vector<1x4x128xf32> to vector<4x128xf32>
    %49 = vector.shape_cast %46 : vector<4x128xf32> to vector<1x4x128xf32>
    tpu.vector_store %arg9[%c0_18, %c0_19, %c0_20], %49 {strides = array<i32>} : memref<1x4x128xf32, #tpu.memory_space<vmem>>, vector<1x4x128xf32>,
    return
  }
  func.func @transform_0(%arg0: i32, %arg1: i32) -> (i32, i32, i32) {
    %c0_i32 = arith.constant 0 : i32
    %c0_i32_0 = arith.constant 0 : i32
    return %arg0, %c0_i32, %arg1 : i32, i32, i32
  }
  func.func @transform_1(%arg0: i32, %arg1: i32) -> (i32, i32, i32) {
    %c0_i32 = arith.constant 0 : i32
    %c0_i32_0 = arith.constant 0 : i32
    return %arg0, %c0_i32, %arg1 : i32, i32, i32
  }
  func.func @transform_2(%arg0: i32, %arg1: i32) -> (i32, i32, i32) {
    %c0_i32 = arith.constant 0 : i32
    %c0_i32_0 = arith.constant 0 : i32
    return %arg0, %c0_i32, %arg1 : i32, i32, i32
  }
  func.func @transform_3(%arg0: i32, %arg1: i32) -> (i32, i32) {
    %c0_i32 = arith.constant 0 : i32
    %c0_i32_0 = arith.constant 0 : i32
    %c0_i32_1 = arith.constant 0 : i32
    return %c0_i32, %c0_i32_0 : i32, i32
  }
  func.func @transform_4(%arg0: i32, %arg1: i32) -> (i32, i32) {
    %c0_i32 = arith.constant 0 : i32
    %c0_i32_0 = arith.constant 0 : i32
    %c0_i32_1 = arith.constant 0 : i32
    return %c0_i32, %c0_i32_0 : i32, i32
  }
  func.func @transform_5(%arg0: i32, %arg1: i32) -> (i32, i32) {
    %c0_i32 = arith.constant 0 : i32
    %c0_i32_0 = arith.constant 0 : i32
    %c0_i32_1 = arith.constant 0 : i32
    return %c0_i32, %c0_i32_0 : i32, i32
  }
  func.func @transform_6(%arg0: i32, %arg1: i32) -> (i32, i32, i32) {
    %c0_i32 = arith.constant 0 : i32
    %c0_i32_0 = arith.constant 0 : i32
    %c0_i32_1 = arith.constant 0 : i32
    return %arg0, %c0_i32, %c0_i32_0 : i32, i32, i32
  }
  func.func @transform_7(%arg0: i32, %arg1: i32) -> (i32, i32, i32) {
    %c0_i32 = arith.constant 0 : i32
    %c0_i32_0 = arith.constant 0 : i32
    return %arg0, %c0_i32, %arg1 : i32, i32, i32
  }
}

</mosaic_0001>

<llo_original>
// kernel: iaff_forward.3
$region0: #{iaff_forward.3}
  #allocation0 [shape = 'u32[]', space=smem, size = 0x4, offset = 0x4, fixed_abs, tag = 'smem constant byte address 0x4 - core index']
  #allocation1 [shape = 'u32[72,128]{1,0:T(1,128)}', space=vmem, size = 0x9000, scoped, tag = 'internal scratch']
  #allocation2 [shape = 'f32[1,1]{1,0:T(1,128)S(1)}', space=vmem, size = 0x200, scoped, tag = 'scoped memory for iaff_forward.3']
  %s0 = inlined_call_operand.vmem [shape: f32[2,4,256], index: 0, kind: input, shape index: {}]
  %s1 = inlined_call_operand.vmem [shape: f32[2,4,256], index: 1, kind: input, shape index: {}]
  %s2 = inlined_call_operand.vmem [shape: f32[2,4,256], index: 2, kind: input, shape index: {}]
  %s3 = inlined_call_operand.vmem [shape: f32[1,4], index: 3, kind: input, shape index: {}]
  %s4 = inlined_call_operand.<no memory space> [shape: f32[1,1], index: 4, kind: input, shape index: {}]
  %s5 = inlined_call_operand.vmem [shape: f32[4,1], index: 5, kind: input, shape index: {}]
  %s6 = inlined_call_operand.vmem [shape: f32[2,4,1], index: 6, kind: input, shape index: {}]
  %s7 = inlined_call_operand.vmem [shape: f32[2,4,256], index: 7, kind: output, shape index: {}]
  %s8 = sld [smem:[#allocation0]]
  $region61: #{iaff_forward.3} parent=0
    _
  %s10 = ssub.s32 1, %s8
  %s11 = scalar_select 0, %s10, %s8
  %v12 = vstv %s4
  %13 = vst [vmem:[#allocation2] sm:$0x1] %v12
  loop: start=0, step=1, limit=6
  $region2: #{iaff_forward.3} parent=0 // loop_pre_header
    _
  $region3: #{iaff_forward.3} parent=0 // loop_header
    %s15 = sphi 0, %s19
    %p16 = scmp.ge.s32.totalorder %s15, 6
    %s22 = sphi 0, %s34
    %s23 = sphi 0, %s30
    %s24 = sphi 0, %s22
    %s25 = sphi 0, %s23
    %s26 = sphi 0, %s24
    %s27 = sphi 0, %s25
    %s39 = sphi 0, %s41
    %s42 = sphi 0, %s39
    %s43 = sphi 0, %s42
    %s59 = sphi 0, %s43
    %s67 = sphi 0, %s69
    %s70 = sphi 0, %s67
    %s71 = sphi 0, %s70
    %s87 = sphi 0, %s71
    %s95 = sphi 0, %s97
    %s98 = sphi 0, %s95
    %s99 = sphi 0, %s98
    %s115 = sphi 0, %s99
    %s119 = sphi 0, %s119
    %s121 = sphi 0, %s119
    %s122 = sphi 0, %s121
    %s136 = sphi 0, %s122
    %s140 = sphi 0, %s140
    %s142 = sphi 0, %s140
    %s143 = sphi 0, %s142
    %s157 = sphi 0, %s143
    %s161 = sphi 0, %s161
    %s163 = sphi 0, %s161
    %s164 = sphi 0, %s163
    %s178 = sphi 0, %s164
    %s184 = sphi 0, %s186
    %s187 = sphi 0, %s184
    %s188 = sphi 0, %s187
    %s204 = sphi 0, %s188
    %s212 = sphi 0, %s214
    %s215 = sphi 0, %s212
    %s216 = sphi 0, %s215
    %s232 = sphi 0, %s216
  $region4: #{iaff_forward.3} parent=0 // loop_header_branch
    %18 = sbr.rel (%p16) target = $region8
  $region5: #{iaff_forward.3} parent=0 // loop_body
    %s20 = ssub.s32 %s15, 1
    %s21 = ssub.s32 %s15, 2
    %s28 = sadd.s32 1, %s23
    %p29 = scmp.ge.s32.totalorder %s28, 2
    %s30 = scalar_select %p29, 0, %s28
    %s31 = sadd.s32 1, %s22
    %s32 = scalar_select %p29, %s31, %s22
    %p33 = scmp.ge.s32.totalorder %s32, 2
    %s34 = scalar_select %p33, 0, %s32
    %s35 = ssub.s32 %s22, %s34
    %s36 = ssub.s32 %s23, %s30
    %s37 = sor.u32 %s35, %s36
    %p38 = scmp.eq.s32.totalorder %s37, 0
    %s40 = sadd.s32 %s39, 1
    %s41 = scalar_select %p38, %s39, %s40
    %p44 = pneg %p38
    %p45 = scmp.eq.s32.totalorder %s15, 3
    %p46 = por %p44, %p45
    %p47 = scmp.ne.s32.totalorder %s39, %s42
    %p48 = scmp.eq.s32.totalorder %s15, 0
    %p49 = por %p47, %p48
    %p50 = scmp.ne.s32.totalorder %s39, %s42
    %p51 = scmp.eq.s32.totalorder %s20, 3
    %p52 = por %p50, %p51
    %p53 = scmp.ne.s32.totalorder %s42, %s43
    %p54 = scmp.eq.s32.totalorder %s20, 0
    %p55 = por %p53, %p54
    %p56 = scmp.ne.s32.totalorder %s42, %s43
    %p57 = scmp.eq.s32.totalorder %s21, 3
    %p58 = por %p56, %p57
    %p60 = scmp.ne.s32.totalorder %s43, %s59
    %p61 = scmp.eq.s32.totalorder %s21, 0
    %p62 = por %p60, %p61
    %s63 = ssub.s32 %s22, %s34
    %s64 = ssub.s32 %s23, %s30
    %s65 = sor.u32 %s63, %s64
    %p66 = scmp.eq.s32.totalorder %s65, 0
    %s68 = sadd.s32 %s67, 1
    %s69 = scalar_select %p66, %s67, %s68
    %p72 = pneg %p66
    %p73 = scmp.eq.s32.totalorder %s15, 3
    %p74 = por %p72, %p73
    %p75 = scmp.ne.s32.totalorder %s67, %s70
    %p76 = scmp.eq.s32.totalorder %s15, 0
    %p77 = por %p75, %p76
    %p78 = scmp.ne.s32.totalorder %s67, %s70
    %p79 = scmp.eq.s32.totalorder %s20, 3
    %p80 = por %p78, %p79
    %p81 = scmp.ne.s32.totalorder %s70, %s71
    %p82 = scmp.eq.s32.totalorder %s20, 0
    %p83 = por %p81, %p82
    %p84 = scmp.ne.s32.totalorder %s70, %s71
    %p85 = scmp.eq.s32.totalorder %s21, 3
    %p86 = por %p84, %p85
    %p88 = scmp.ne.s32.totalorder %s71, %s87
    %p89 = scmp.eq.s32.totalorder %s21, 0
    %p90 = por %p88, %p89
    %s91 = ssub.s32 %s22, %s34
    %s92 = ssub.s32 %s23, %s30
    %s93 = sor.u32 %s91, %s92
    %p94 = scmp.eq.s32.totalorder %s93, 0
    %s96 = sadd.s32 %s95, 1
    %s97 = scalar_select %p94, %s95, %s96
    %p100 = pneg %p94
    %p101 = scmp.eq.s32.totalorder %s15, 3
    %p102 = por %p100, %p101
    %p103 = scmp.ne.s32.totalorder %s95, %s98
    %p104 = scmp.eq.s32.totalorder %s15, 0
    %p105 = por %p103, %p104
    %p106 = scmp.ne.s32.totalorder %s95, %s98
    %p107 = scmp.eq.s32.totalorder %s20, 3
    %p108 = por %p106, %p107
    %p109 = scmp.ne.s32.totalorder %s98, %s99
    %p110 = scmp.eq.s32.totalorder %s20, 0
    %p111 = por %p109, %p110
    %p112 = scmp.ne.s32.totalorder %s98, %s99
    %p113 = scmp.eq.s32.totalorder %s21, 3
    %p114 = por %p112, %p113
    %p116 = scmp.ne.s32.totalorder %s99, %s115
    %p117 = scmp.eq.s32.totalorder %s21, 0
    %p118 = por %p116, %p117
    %s120 = sadd.s32 %s119, 1
    %p123 = scmp.eq.s32.totalorder %s15, 3
    %p124 = scmp.ne.s32.totalorder %s119, %s121
    %p125 = scmp.eq.s32.totalorder %s15, 0
    %p126 = por %p124, %p125
    %p127 = scmp.ne.s32.totalorder %s119, %s121
    %p128 = scmp.eq.s32.totalorder %s20, 3
    %p129 = por %p127, %p128
    %p130 = scmp.ne.s32.totalorder %s121, %s122
    %p131 = scmp.eq.s32.totalorder %s20, 0
    %p132 = por %p130, %p131
    %p133 = scmp.ne.s32.totalorder %s121, %s122
    %p134 = scmp.eq.s32.totalorder %s21, 3
    %p135 = por %p133, %p134
    %p137 = scmp.ne.s32.totalorder %s122, %s136
    %p138 = scmp.eq.s32.totalorder %s21, 0
    %p139 = por %p137, %p138
    %s141 = sadd.s32 %s140, 1
    %p144 = scmp.eq.s32.totalorder %s15, 3
    %p145 = scmp.ne.s32.totalorder %s140, %s142
    %p146 = scmp.eq.s32.totalorder %s15, 0
    %p147 = por %p145, %p146
    %p148 = scmp.ne.s32.totalorder %s140, %s142
    %p149 = scmp.eq.s32.totalorder %s20, 3
    %p150 = por %p148, %p149
    %p151 = scmp.ne.s32.totalorder %s142, %s143
    %p152 = scmp.eq.s32.totalorder %s20, 0
    %p153 = por %p151, %p152
    %p154 = scmp.ne.s32.totalorder %s142, %s143
    %p155 = scmp.eq.s32.totalorder %s21, 3
    %p156 = por %p154, %p155
    %p158 = scmp.ne.s32.totalorder %s143, %s157
    %p159 = scmp.eq.s32.totalorder %s21, 0
    %p160 = por %p158, %p159
    %s162 = sadd.s32 %s161, 1
    %p165 = scmp.eq.s32.totalorder %s15, 3
    %p166 = scmp.ne.s32.totalorder %s161, %s163
    %p167 = scmp.eq.s32.totalorder %s15, 0
    %p168 = por %p166, %p167
    %p169 = scmp.ne.s32.totalorder %s161, %s163
    %p170 = scmp.eq.s32.totalorder %s20, 3
    %p171 = por %p169, %p170
    %p172 = scmp.ne.s32.totalorder %s163, %s164
    %p173 = scmp.eq.s32.totalorder %s20, 0
    %p174 = por %p172, %p173
    %p175 = scmp.ne.s32.totalorder %s163, %s164
    %p176 = scmp.eq.s32.totalorder %s21, 3
    %p177 = por %p175, %p176
    %p179 = scmp.ne.s32.totalorder %s164, %s178
    %p180 = scmp.eq.s32.totalorder %s21, 0
    %p181 = por %p179, %p180
    %s182 = ssub.s32 %s22, %s34
    %p183 = scmp.eq.s32.totalorder %s182, 0
    %s185 = sadd.s32 %s184, 1
    %s186 = scalar_select %p183, %s184, %s185
    %p189 = pneg %p183
    %p190 = scmp.eq.s32.totalorder %s15, 3
    %p191 = por %p189, %p190
    %p192 = scmp.ne.s32.totalorder %s184, %s187
    %p193 = scmp.eq.s32.totalorder %s15, 0
    %p194 = por %p192, %p193
    %p195 = scmp.ne.s32.totalorder %s184, %s187
    %p196 = scmp.eq.s32.totalorder %s20, 3
    %p197 = por %p195, %p196
    %p198 = scmp.ne.s32.totalorder %s187, %s188
    %p199 = scmp.eq.s32.totalorder %s20, 0
    %p200 = por %p198, %p199
    %p201 = scmp.ne.s32.totalorder %s187, %s188
    %p202 = scmp.eq.s32.totalorder %s21, 3
    %p203 = por %p201, %p202
    %p205 = scmp.ne.s32.totalorder %s188, %s204
    %p206 = scmp.eq.s32.totalorder %s21, 0
    %p207 = por %p205, %p206
    %s208 = ssub.s32 %s22, %s34
    %s209 = ssub.s32 %s23, %s30
    %s210 = sor.u32 %s208, %s209
    %p211 = scmp.eq.s32.totalorder %s210, 0
    %s213 = sadd.s32 %s212, 1
    %s214 = scalar_select %p211, %s212, %s213
    %p217 = pneg %p211
    %p218 = scmp.eq.s32.totalorder %s15, 3
    %p219 = por %p217, %p218
    %p220 = scmp.ne.s32.totalorder %s212, %s215
    %p221 = scmp.eq.s32.totalorder %s15, 0
    %p222 = por %p220, %p221
    %p223 = scmp.ne.s32.totalorder %s212, %s215
    %p224 = scmp.eq.s32.totalorder %s20, 3
    %p225 = por %p223, %p224
    %p226 = scmp.ne.s32.totalorder %s215, %s216
    %p227 = scmp.eq.s32.totalorder %s20, 0
    %p228 = por %p226, %p227
    %p229 = scmp.ne.s32.totalorder %s215, %s216
    %p230 = scmp.eq.s32.totalorder %s21, 3
    %p231 = por %p229, %p230
    %p233 = scmp.ne.s32.totalorder %s216, %s232
    %p234 = scmp.eq.s32.totalorder %s21, 0
    %p235 = por %p233, %p234
    %p236 = scmp.le.s32.totalorder 1, %s15
    %p237 = scmp.lt.s32.totalorder %s15, 5
    %p238 = pnand %p236, %p237
    %p239 = pneg %p238
    // Predicated region
    $region9: #{iaff_forward.3} parent=5 // pred_check
      _
    $region10: #{iaff_forward.3} parent=5 // pred_check_branch
      %241 = sbr.rel (%p238) target = $region12
    $region11: #{iaff_forward.3} parent=5 // pred_region
      %s242 = ssub.s32 %s15, 1
      // Predicated region
      $region13: #{iaff_forward.3} parent=11 // pred_check
        %p243 = pneg %p132
      $region14: #{iaff_forward.3} parent=11 // pred_check_branch
        %245 = sbr.rel (%p243) target = $region16
      $region15: #{iaff_forward.3} parent=11 // pred_region
        _
      $region16: #{iaff_forward.3} parent=11 // pred_fallthru
        _
      // Predicated region
      $region17: #{iaff_forward.3} parent=11 // pred_check
        %p246 = pneg %p153
      $region18: #{iaff_forward.3} parent=11 // pred_check_branch
        %248 = sbr.rel (%p246) target = $region20
      $region19: #{iaff_forward.3} parent=11 // pred_region
        _
      $region20: #{iaff_forward.3} parent=11 // pred_fallthru
        _
      // Predicated region
      $region21: #{iaff_forward.3} parent=11 // pred_check
        %p249 = pneg %p174
      $region22: #{iaff_forward.3} parent=11 // pred_check_branch
        %251 = sbr.rel (%p249) target = $region24
      $region23: #{iaff_forward.3} parent=11 // pred_region
        _
      $region24: #{iaff_forward.3} parent=11 // pred_fallthru
        _
    $region12: #{iaff_forward.3} parent=5 // pred_fallthru
      _
    %p252 = scmp.lt.s32.totalorder %s15, 4
    // Predicated region
    $region25: #{iaff_forward.3} parent=5 // pred_check
      %p253 = pneg %p252
    $region26: #{iaff_forward.3} parent=5 // pred_check_branch
      %255 = sbr.rel (%p253) target = $region28
    $region27: #{iaff_forward.3} parent=5 // pred_region
      // Predicated region
      $region29: #{iaff_forward.3} parent=27 // pred_check
        %p256 = pneg %p49
      $region30: #{iaff_forward.3} parent=27 // pred_check_branch
        %258 = sbr.rel (%p256) target = $region32
      $region31: #{iaff_forward.3} parent=27 // pred_region
        %p259 = scmp.lt.s32.totalorder %s22, 1
        %s260 = scalar_select %p259, %s22, 1
        %p261 = scmp.lt.s32.totalorder %s23, 1
        %s262 = scalar_select %p261, %s23, 1
        %s263 = smul.addr %s260, 2
        %s264 = sadd.s32 %s262, %s263
        %s265 = smul.addr %s264, 4
        %s266 = scalar_lea.vmem %s0, %s265
      $region32: #{iaff_forward.3} parent=27 // pred_fallthru
        _
      // Predicated region
      $region33: #{iaff_forward.3} parent=27 // pred_check
        %p267 = pneg %p77
      $region34: #{iaff_forward.3} parent=27 // pred_check_branch
        %269 = sbr.rel (%p267) target = $region36
      $region35: #{iaff_forward.3} parent=27 // pred_region
        %p270 = scmp.lt.s32.totalorder %s22, 1
        %s271 = scalar_select %p270, %s22, 1
        %p272 = scmp.lt.s32.totalorder %s23, 1
        %s273 = scalar_select %p272, %s23, 1
        %s274 = smul.addr %s271, 2
        %s275 = sadd.s32 %s273, %s274
        %s276 = smul.addr %s275, 4
        %s277 = scalar_lea.vmem %s1, %s276
      $region36: #{iaff_forward.3} parent=27 // pred_fallthru
        _
      // Predicated region
      $region37: #{iaff_forward.3} parent=27 // pred_check
        %p278 = pneg %p105
      $region38: #{iaff_forward.3} parent=27 // pred_check_branch
        %280 = sbr.rel (%p278) target = $region40
      $region39: #{iaff_forward.3} parent=27 // pred_region
        %p281 = scmp.lt.s32.totalorder %s22, 1
        %s282 = scalar_select %p281, %s22, 1
        %p283 = scmp.lt.s32.totalorder %s23, 1
        %s284 = scalar_select %p283, %s23, 1
        %s285 = smul.addr %s282, 2
        %s286 = sadd.s32 %s284, %s285
        %s287 = smul.addr %s286, 4
        %s288 = scalar_lea.vmem %s2, %s287
      $region40: #{iaff_forward.3} parent=27 // pred_fallthru
        _
      // Predicated region
      $region41: #{iaff_forward.3} parent=27 // pred_check
        %p289 = pneg %p194
      $region42: #{iaff_forward.3} parent=27 // pred_check_branch
        %291 = sbr.rel (%p289) target = $region44
      $region43: #{iaff_forward.3} parent=27 // pred_region
        %p292 = scmp.lt.s32.totalorder %s22, 1
        %s293 = scalar_select %p292, %s22, 1
        %s294 = smul.addr %s293, 4
        %s295 = scalar_lea.vmem %s6, %s294
      $region44: #{iaff_forward.3} parent=27 // pred_fallthru
        _
    $region28: #{iaff_forward.3} parent=5 // pred_fallthru
      _
    %p296 = scmp.le.s32.totalorder 1, %s15
    %p297 = scmp.lt.s32.totalorder %s15, 5
    %p298 = pnand %p296, %p297
    %p299 = pneg %p298
    // Predicated region
    $region45: #{iaff_forward.3} parent=5 // pred_check
      _
    $region46: #{iaff_forward.3} parent=5 // pred_check_branch
      %301 = sbr.rel (%p298) target = $region48
    $region47: #{iaff_forward.3} parent=5 // pred_region
      %s302 = ssub.s32 %s15, 1
      %p303 = scmp.lt.s32.totalorder %s24, 1
      %s304 = scalar_select %p303, %s24, 1
      %p305 = scmp.lt.s32.totalorder %s25, 1
      %s306 = scalar_select %p305, %s25, 1
      %s307 = smul.addr %s304, 2
      %s308 = sadd.s32 %s306, %s307
      %s309 = smul.addr %s308, 4
      %s310 = scalar_lea.vmem %s0, %s309
      %p311 = pneg %p55
      %p312 = pneg %p52
      %p313 = scmp.lt.s32.totalorder %s24, 1
      %s314 = scalar_select %p313, %s24, 1
      %p315 = scmp.lt.s32.totalorder %s25, 1
      %s316 = scalar_select %p315, %s25, 1
      %s317 = smul.addr %s314, 2
      %s318 = sadd.s32 %s316, %s317
      %s319 = smul.addr %s318, 4
      %s320 = scalar_lea.vmem %s1, %s319
      %p321 = pneg %p83
      %p322 = pneg %p80
      %p323 = scmp.lt.s32.totalorder %s24, 1
      %s324 = scalar_select %p323, %s24, 1
      %p325 = scmp.lt.s32.totalorder %s25, 1
      %s326 = scalar_select %p325, %s25, 1
      %s327 = smul.addr %s324, 2
      %s328 = sadd.s32 %s326, %s327
      %s329 = smul.addr %s328, 4
      %s330 = scalar_lea.vmem %s2, %s329
      %p331 = pneg %p111
      %p332 = pneg %p108
      %p333 = pneg %p132
      %p334 = pneg %p129
      %p335 = pneg %p153
      %p336 = pneg %p150
      %p337 = pneg %p174
      %p338 = pneg %p171
      %p339 = scmp.lt.s32.totalorder %s24, 1
      %s340 = scalar_select %p339, %s24, 1
      %s341 = smul.addr %s340, 4
      %s342 = scalar_lea.vmem %s6, %s341
      %p343 = pneg %p200
      %p344 = pneg %p197
      %p345 = pneg %p228
      %p346 = pneg %p225
      %p347 = scmp.lt.s32.totalorder %s24, 1
      %s348 = scalar_select %p347, %s24, 1
      %p349 = scmp.lt.s32.totalorder %s25, 1
      %s350 = scalar_select %p349, %s25, 1
      %s351 = smul.addr %s348, 2
      %s352 = sadd.s32 %s350, %s351
      %s353 = smul.addr %s352, 4
      %s354 = scalar_lea.vmem %s7, %s353
      %p355 = scmp.lt.s32.totalorder %s24, 1
      %s356 = scalar_select %p355, %s24, 1
      %p357 = scmp.lt.s32.totalorder %s25, 1
      %s358 = scalar_select %p357, %s25, 1
      %s359 = smul.addr %s356, 2
      %s360 = sadd.s32 %s358, %s359
      %s361 = smul.addr %s360, 4
      %s362 = scalar_lea.vmem %s0, %s361
      %p363 = scmp.lt.s32.totalorder %s24, 1
      %s364 = scalar_select %p363, %s24, 1
      %p365 = scmp.lt.s32.totalorder %s25, 1
      %s366 = scalar_select %p365, %s25, 1
      %s367 = smul.addr %s364, 2
      %s368 = sadd.s32 %s366, %s367
      %s369 = smul.addr %s368, 4
      %s370 = scalar_lea.vmem %s1, %s369
      %p371 = scmp.lt.s32.totalorder %s24, 1
      %s372 = scalar_select %p371, %s24, 1
      %p373 = scmp.lt.s32.totalorder %s25, 1
      %s374 = scalar_select %p373, %s25, 1
      %s375 = smul.addr %s372, 2
      %s376 = sadd.s32 %s374, %s375
      %s377 = smul.addr %s376, 4
      %s378 = scalar_lea.vmem %s2, %s377
      %p379 = scmp.lt.s32.totalorder %s24, 1
      %s380 = scalar_select %p379, %s24, 1
      %s381 = smul.addr %s380, 4
      %s382 = scalar_lea.vmem %s6, %s381
      %p383 = scmp.lt.s32.totalorder %s24, 1
      %s384 = scalar_select %p383, %s24, 1
      %p385 = scmp.lt.s32.totalorder %s25, 1
      %s386 = scalar_select %p385, %s25, 1
      %s387 = smul.addr %s384, 2
      %s388 = sadd.s32 %s386, %s387
      %s389 = smul.addr %s388, 4
      %s390 = scalar_lea.vmem %s7, %s389
      %v391 = vld [vmem:[%s362] sm:$0xf]
      %v392 = vld [vmem:[%s370] sm:$0xf]
      %v393 = vld [vmem:[%s378] sm:$0xf]
      %v394 = vld [vmem:[%s3] sm:$0x1]
      %v395 = vld [vmem:[#allocation2] sm:$0x1]
      %v396 = vld [vmem:[%s5] sm:$0xf]
      %v397 = vld [vmem:[%s382] sm:$0xf]
      %399 = vset.pattern.permute.xlu0 0
      %400 = vperm.xlu0 %399, %v394
      %v401 = vpop.permute.xlu0 %400
      %v403 = vperm.slane %v401, 0
      %v404 = vmul.f32 %v403, %v393
      %405 = vset.pattern.permute.xlu0 1
      %406 = vperm.xlu0 %405, %v394
      %v407 = vpop.permute.xlu0 %406
      %v409 = vperm.slane %v407, 0
      %v410 = vmul.f32 %v409, %v393
      %v412 = vrot.slane %v410, 1
      %v414 = vadd.f32 %v404, %v412
      %415 = vset.pattern.permute.xlu0 2
      %416 = vperm.xlu0 %415, %v394
      %v417 = vpop.permute.xlu0 %416
      %v419 = vperm.slane %v417, 0
      %v420 = vmul.f32 %v419, %v393
      %v422 = vrot.slane %v420, 2
      %v424 = vadd.f32 %v414, %v422
      %425 = vset.pattern.permute.xlu0 3
      %426 = vperm.xlu0 %425, %v394
      %v427 = vpop.permute.xlu0 %426
      %v429 = vperm.slane %v427, 0
      %v430 = vmul.f32 %v429, %v393
      %v432 = vrot.slane %v430, 3
      %v434 = vadd.f32 %v424, %v432
      %436 = vset.pattern.permute.xlu0 0
      %437 = vperm.xlu0 %436, %v395
      %v438 = vpop.permute.xlu0 %437
      %v440 = vperm.slane %v438, 0
      %v441 = vadd.f32 %v434, %v440
      %v442 = vmax.f32 %v441, 0.0
      %444 = vset.pattern.permute.xlu0 0
      %445 = vperm.xlu0 %444, %v396
      %v446 = vpop.permute.xlu0 %445
      %v448 = vperm.slane %v442, 0
      %v449 = vmul.f32 %v446, %v448
      %451 = vset.pattern.permute.xlu0 0
      %452 = vperm.xlu0 %451, %v397
      %v453 = vpop.permute.xlu0 %452
      %v455 = vadd.f32 %v449, %v453
      %v456 = vxor.u32 %v455, 2147483648
      %v457 = vmul.f32 %v456, 1.442695
      %v458 = vpow.pop %v457
      %v459 = vadd.f32 %v458, 1.0
      %v460 = vrcp.pop %v459
      %v461 = vmul.f32 %v459, %v460
      %v462 = vsub.f32 1.0, %v461
      %v463 = vmul.f32 %v460, %v462
      %v464 = vadd.f32 %v460, %v463
      %vm465 = vweird.f32 %v459
      %vm466 = vweird.f32 %v460
      %vm467 = vmor %vm465, %vm466
      %v468 = vsel %vm467, %v460, %v464
      %v469 = vand.u32 2147483647, %v459
      %vm470 = vcmp.eq.f32.partialorder %v469, 8.507059e+37
      %v471 = vand.u32 %v459, 2147483648
      %v472 = vor.u32 1.1754944e-38, %v471
      %v473 = vsel %vm470, %v472, %v468
      %v474 = vmul.f32 1.0, %v473
      %v475 = vsub.f32 %v391, %v392
      %v476 = vmul.f32 %v474, %v475
      %v477 = vadd.f32 %v392, %v476
      %478 = vst [vmem:[%s390] sm:$0xf] %v477
      %p479 = scmp.lt.s32.totalorder %s24, 1
      %s480 = scalar_select %p479, %s24, 1
      %p481 = scmp.lt.s32.totalorder %s25, 1
      %s482 = scalar_select %p481, %s25, 1
      %s483 = smul.addr %s480, 2
      %s484 = sadd.s32 %s482, %s483
      %s485 = smul.addr %s484, 4
      %s486 = scalar_lea.vmem %s7, %s485
      // Predicated region
      $region49: #{iaff_forward.3} parent=47 // pred_check
        %p487 = pneg %p225
      $region50: #{iaff_forward.3} parent=47 // pred_check_branch
        %489 = sbr.rel (%p487) target = $region52
      $region51: #{iaff_forward.3} parent=47 // pred_region
        _
      $region52: #{iaff_forward.3} parent=47 // pred_fallthru
        _
    $region48: #{iaff_forward.3} parent=5 // pred_fallthru
      _
    %p490 = scmp.le.s32.totalorder 2, %s15
    // Predicated region
    $region53: #{iaff_forward.3} parent=5 // pred_check
      %p491 = pneg %p490
    $region54: #{iaff_forward.3} parent=5 // pred_check_branch
      %493 = sbr.rel (%p491) target = $region56
    $region55: #{iaff_forward.3} parent=5 // pred_region
      %s494 = ssub.s32 %s15, 2
      // Predicated region
      $region57: #{iaff_forward.3} parent=55 // pred_check
        %p495 = pneg %p231
      $region58: #{iaff_forward.3} parent=55 // pred_check_branch
        %497 = sbr.rel (%p495) target = $region60
      $region59: #{iaff_forward.3} parent=55 // pred_region
        %p498 = scmp.lt.s32.totalorder %s26, 1
        %s499 = scalar_select %p498, %s26, 1
        %p500 = scmp.lt.s32.totalorder %s27, 1
        %s501 = scalar_select %p500, %s27, 1
        %s502 = smul.addr %s499, 2
        %s503 = sadd.s32 %s501, %s502
        %s504 = smul.addr %s503, 4
        %s505 = scalar_lea.vmem %s7, %s504
      $region60: #{iaff_forward.3} parent=55 // pred_fallthru
        _
    $region56: #{iaff_forward.3} parent=5 // pred_fallthru
      _
  $region6: #{iaff_forward.3} parent=0 // loop_footer
    %s19 = sadd.s32 1, %s15
  $region7: #{iaff_forward.3} parent=0 // loop_footer_branch
    %14 = sbr.rel target = $region3
  $region8: #{iaff_forward.3} parent=0 // loop_exit
    _

// kernel: iaff_forward.2
$region0: #{iaff_forward.2}
  #allocation0 [shape = 'u32[]', space=smem, size = 0x4, offset = 0x4, fixed_abs, tag = 'smem constant byte address 0x4 - core index']
  #allocation1 [shape = 'u32[72,128]{1,0:T(1,128)}', space=vmem, size = 0x9000, scoped, tag = 'internal scratch']
  #allocation2 [shape = 'f32[1,1]{1,0:T(1,128)S(1)}', space=vmem, size = 0x200, scoped, tag = 'scoped memory for iaff_forward.2']
  %s0 = inlined_call_operand.vmem [shape: f32[2,4,256], index: 0, kind: input, shape index: {}]
  %s1 = inlined_call_operand.vmem [shape: f32[2,4,256], index: 1, kind: input, shape index: {}]
  %s2 = inlined_call_operand.vmem [shape: f32[1,4], index: 2, kind: input, shape index: {}]
  %s3 = inlined_call_operand.<no memory space> [shape: f32[1,1], index: 3, kind: input, shape index: {}]
  %s4 = inlined_call_operand.vmem [shape: f32[4,1], index: 4, kind: input, shape index: {}]
  %s5 = inlined_call_operand.vmem [shape: f32[2,4,1], index: 5, kind: input, shape index: {}]
  %s6 = inlined_call_operand.vmem [shape: f32[2,4,256], index: 6, kind: output, shape index: {0}]
  %s7 = inlined_call_operand.vmem [shape: f32[2,4,256], index: 7, kind: output, shape index: {1}]
  %8 = xla_tuple %s6, %s7
  %s9 = sld [smem:[#allocation0]]
  $region65: #{iaff_forward.2} parent=0
    _
  %s11 = ssub.s32 1, %s9
  %s12 = scalar_select 0, %s11, %s9
  %v13 = vstv %s3
  %14 = vst [vmem:[#allocation2] sm:$0x1] %v13
  loop: start=0, step=1, limit=6
  $region2: #{iaff_forward.2} parent=0 // loop_pre_header
    _
  $region3: #{iaff_forward.2} parent=0 // loop_header
    %s16 = sphi 0, %s20
    %p17 = scmp.ge.s32.totalorder %s16, 6
    %s23 = sphi 0, %s35
    %s24 = sphi 0, %s31
    %s25 = sphi 0, %s23
    %s26 = sphi 0, %s24
    %s27 = sphi 0, %s25
    %s28 = sphi 0, %s26
    %s40 = sphi 0, %s42
    %s43 = sphi 0, %s40
    %s44 = sphi 0, %s43
    %s60 = sphi 0, %s44
    %s68 = sphi 0, %s70
    %s71 = sphi 0, %s68
    %s72 = sphi 0, %s71
    %s88 = sphi 0, %s72
    %s92 = sphi 0, %s92
    %s94 = sphi 0, %s92
    %s95 = sphi 0, %s94
    %s109 = sphi 0, %s95
    %s113 = sphi 0, %s113
    %s115 = sphi 0, %s113
    %s116 = sphi 0, %s115
    %s130 = sphi 0, %s116
    %s134 = sphi 0, %s134
    %s136 = sphi 0, %s134
    %s137 = sphi 0, %s136
    %s151 = sphi 0, %s137
    %s157 = sphi 0, %s159
    %s160 = sphi 0, %s157
    %s161 = sphi 0, %s160
    %s177 = sphi 0, %s161
    %s185 = sphi 0, %s187
    %s188 = sphi 0, %s185
    %s189 = sphi 0, %s188
    %s205 = sphi 0, %s189
    %s213 = sphi 0, %s215
    %s216 = sphi 0, %s213
    %s217 = sphi 0, %s216
    %s233 = sphi 0, %s217
  $region4: #{iaff_forward.2} parent=0 // loop_header_branch
    %19 = sbr.rel (%p17) target = $region8
  $region5: #{iaff_forward.2} parent=0 // loop_body
    %s21 = ssub.s32 %s16, 1
    %s22 = ssub.s32 %s16, 2
    %s29 = sadd.s32 1, %s24
    %p30 = scmp.ge.s32.totalorder %s29, 2
    %s31 = scalar_select %p30, 0, %s29
    %s32 = sadd.s32 1, %s23
    %s33 = scalar_select %p30, %s32, %s23
    %p34 = scmp.ge.s32.totalorder %s33, 2
    %s35 = scalar_select %p34, 0, %s33
    %s36 = ssub.s32 %s23, %s35
    %s37 = ssub.s32 %s24, %s31
    %s38 = sor.u32 %s36, %s37
    %p39 = scmp.eq.s32.totalorder %s38, 0
    %s41 = sadd.s32 %s40, 1
    %s42 = scalar_select %p39, %s40, %s41
    %p45 = pneg %p39
    %p46 = scmp.eq.s32.totalorder %s16, 3
    %p47 = por %p45, %p46
    %p48 = scmp.ne.s32.totalorder %s40, %s43
    %p49 = scmp.eq.s32.totalorder %s16, 0
    %p50 = por %p48, %p49
    %p51 = scmp.ne.s32.totalorder %s40, %s43
    %p52 = scmp.eq.s32.totalorder %s21, 3
    %p53 = por %p51, %p52
    %p54 = scmp.ne.s32.totalorder %s43, %s44
    %p55 = scmp.eq.s32.totalorder %s21, 0
    %p56 = por %p54, %p55
    %p57 = scmp.ne.s32.totalorder %s43, %s44
    %p58 = scmp.eq.s32.totalorder %s22, 3
    %p59 = por %p57, %p58
    %p61 = scmp.ne.s32.totalorder %s44, %s60
    %p62 = scmp.eq.s32.totalorder %s22, 0
    %p63 = por %p61, %p62
    %s64 = ssub.s32 %s23, %s35
    %s65 = ssub.s32 %s24, %s31
    %s66 = sor.u32 %s64, %s65
    %p67 = scmp.eq.s32.totalorder %s66, 0
    %s69 = sadd.s32 %s68, 1
    %s70 = scalar_select %p67, %s68, %s69
    %p73 = pneg %p67
    %p74 = scmp.eq.s32.totalorder %s16, 3
    %p75 = por %p73, %p74
    %p76 = scmp.ne.s32.totalorder %s68, %s71
    %p77 = scmp.eq.s32.totalorder %s16, 0
    %p78 = por %p76, %p77
    %p79 = scmp.ne.s32.totalorder %s68, %s71
    %p80 = scmp.eq.s32.totalorder %s21, 3
    %p81 = por %p79, %p80
    %p82 = scmp.ne.s32.totalorder %s71, %s72
    %p83 = scmp.eq.s32.totalorder %s21, 0
    %p84 = por %p82, %p83
    %p85 = scmp.ne.s32.totalorder %s71, %s72
    %p86 = scmp.eq.s32.totalorder %s22, 3
    %p87 = por %p85, %p86
    %p89 = scmp.ne.s32.totalorder %s72, %s88
    %p90 = scmp.eq.s32.totalorder %s22, 0
    %p91 = por %p89, %p90
    %s93 = sadd.s32 %s92, 1
    %p96 = scmp.eq.s32.totalorder %s16, 3
    %p97 = scmp.ne.s32.totalorder %s92, %s94
    %p98 = scmp.eq.s32.totalorder %s16, 0
    %p99 = por %p97, %p98
    %p100 = scmp.ne.s32.totalorder %s92, %s94
    %p101 = scmp.eq.s32.totalorder %s21, 3
    %p102 = por %p100, %p101
    %p103 = scmp.ne.s32.totalorder %s94, %s95
    %p104 = scmp.eq.s32.totalorder %s21, 0
    %p105 = por %p103, %p104
    %p106 = scmp.ne.s32.totalorder %s94, %s95
    %p107 = scmp.eq.s32.totalorder %s22, 3
    %p108 = por %p106, %p107
    %p110 = scmp.ne.s32.totalorder %s95, %s109
    %p111 = scmp.eq.s32.totalorder %s22, 0
    %p112 = por %p110, %p111
    %s114 = sadd.s32 %s113, 1
    %p117 = scmp.eq.s32.totalorder %s16, 3
    %p118 = scmp.ne.s32.totalorder %s113, %s115
    %p119 = scmp.eq.s32.totalorder %s16, 0
    %p120 = por %p118, %p119
    %p121 = scmp.ne.s32.totalorder %s113, %s115
    %p122 = scmp.eq.s32.totalorder %s21, 3
    %p123 = por %p121, %p122
    %p124 = scmp.ne.s32.totalorder %s115, %s116
    %p125 = scmp.eq.s32.totalorder %s21, 0
    %p126 = por %p124, %p125
    %p127 = scmp.ne.s32.totalorder %s115, %s116
    %p128 = scmp.eq.s32.totalorder %s22, 3
    %p129 = por %p127, %p128
    %p131 = scmp.ne.s32.totalorder %s116, %s130
    %p132 = scmp.eq.s32.totalorder %s22, 0
    %p133 = por %p131, %p132
    %s135 = sadd.s32 %s134, 1
    %p138 = scmp.eq.s32.totalorder %s16, 3
    %p139 = scmp.ne.s32.totalorder %s134, %s136
    %p140 = scmp.eq.s32.totalorder %s16, 0
    %p141 = por %p139, %p140
    %p142 = scmp.ne.s32.totalorder %s134, %s136
    %p143 = scmp.eq.s32.totalorder %s21, 3
    %p144 = por %p142, %p143
    %p145 = scmp.ne.s32.totalorder %s136, %s137
    %p146 = scmp.eq.s32.totalorder %s21, 0
    %p147 = por %p145, %p146
    %p148 = scmp.ne.s32.totalorder %s136, %s137
    %p149 = scmp.eq.s32.totalorder %s22, 3
    %p150 = por %p148, %p149
    %p152 = scmp.ne.s32.totalorder %s137, %s151
    %p153 = scmp.eq.s32.totalorder %s22, 0
    %p154 = por %p152, %p153
    %s155 = ssub.s32 %s23, %s35
    %p156 = scmp.eq.s32.totalorder %s155, 0
    %s158 = sadd.s32 %s157, 1
    %s159 = scalar_select %p156, %s157, %s158
    %p162 = pneg %p156
    %p163 = scmp.eq.s32.totalorder %s16, 3
    %p164 = por %p162, %p163
    %p165 = scmp.ne.s32.totalorder %s157, %s160
    %p166 = scmp.eq.s32.totalorder %s16, 0
    %p167 = por %p165, %p166
    %p168 = scmp.ne.s32.totalorder %s157, %s160
    %p169 = scmp.eq.s32.totalorder %s21, 3
    %p170 = por %p168, %p169
    %p171 = scmp.ne.s32.totalorder %s160, %s161
    %p172 = scmp.eq.s32.totalorder %s21, 0
    %p173 = por %p171, %p172
    %p174 = scmp.ne.s32.totalorder %s160, %s161
    %p175 = scmp.eq.s32.totalorder %s22, 3
    %p176 = por %p174, %p175
    %p178 = scmp.ne.s32.totalorder %s161, %s177
    %p179 = scmp.eq.s32.totalorder %s22, 0
    %p180 = por %p178, %p179
    %s181 = ssub.s32 %s23, %s35
    %s182 = ssub.s32 %s24, %s31
    %s183 = sor.u32 %s181, %s182
    %p184 = scmp.eq.s32.totalorder %s183, 0
    %s186 = sadd.s32 %s185, 1
    %s187 = scalar_select %p184, %s185, %s186
    %p190 = pneg %p184
    %p191 = scmp.eq.s32.totalorder %s16, 3
    %p192 = por %p190, %p191
    %p193 = scmp.ne.s32.totalorder %s185, %s188
    %p194 = scmp.eq.s32.totalorder %s16, 0
    %p195 = por %p193, %p194
    %p196 = scmp.ne.s32.totalorder %s185, %s188
    %p197 = scmp.eq.s32.totalorder %s21, 3
    %p198 = por %p196, %p197
    %p199 = scmp.ne.s32.totalorder %s188, %s189
    %p200 = scmp.eq.s32.totalorder %s21, 0
    %p201 = por %p199, %p200
    %p202 = scmp.ne.s32.totalorder %s188, %s189
    %p203 = scmp.eq.s32.totalorder %s22, 3
    %p204 = por %p202, %p203
    %p206 = scmp.ne.s32.totalorder %s189, %s205
    %p207 = scmp.eq.s32.totalorder %s22, 0
    %p208 = por %p206, %p207
    %s209 = ssub.s32 %s23, %s35
    %s210 = ssub.s32 %s24, %s31
    %s211 = sor.u32 %s209, %s210
    %p212 = scmp.eq.s32.totalorder %s211, 0
    %s214 = sadd.s32 %s213, 1
    %s215 = scalar_select %p212, %s213, %s214
    %p218 = pneg %p212
    %p219 = scmp.eq.s32.totalorder %s16, 3
    %p220 = por %p218, %p219
    %p221 = scmp.ne.s32.totalorder %s213, %s216
    %p222 = scmp.eq.s32.totalorder %s16, 0
    %p223 = por %p221, %p222
    %p224 = scmp.ne.s32.totalorder %s213, %s216
    %p225 = scmp.eq.s32.totalorder %s21, 3
    %p226 = por %p224, %p225
    %p227 = scmp.ne.s32.totalorder %s216, %s217
    %p228 = scmp.eq.s32.totalorder %s21, 0
    %p229 = por %p227, %p228
    %p230 = scmp.ne.s32.totalorder %s216, %s217
    %p231 = scmp.eq.s32.totalorder %s22, 3
    %p232 = por %p230, %p231
    %p234 = scmp.ne.s32.totalorder %s217, %s233
    %p235 = scmp.eq.s32.totalorder %s22, 0
    %p236 = por %p234, %p235
    %p237 = scmp.le.s32.totalorder 1, %s16
    %p238 = scmp.lt.s32.totalorder %s16, 5
    %p239 = pnand %p237, %p238
    %p240 = pneg %p239
    // Predicated region
    $region9: #{iaff_forward.2} parent=5 // pred_check
      _
    $region10: #{iaff_forward.2} parent=5 // pred_check_branch
      %242 = sbr.rel (%p239) target = $region12
    $region11: #{iaff_forward.2} parent=5 // pred_region
      %s243 = ssub.s32 %s16, 1
      // Predicated region
      $region13: #{iaff_forward.2} parent=11 // pred_check
        %p244 = pneg %p105
      $region14: #{iaff_forward.2} parent=11 // pred_check_branch
        %246 = sbr.rel (%p244) target = $region16
      $region15: #{iaff_forward.2} parent=11 // pred_region
        _
      $region16: #{iaff_forward.2} parent=11 // pred_fallthru
        _
      // Predicated region
      $region17: #{iaff_forward.2} parent=11 // pred_check
        %p247 = pneg %p126
      $region18: #{iaff_forward.2} parent=11 // pred_check_branch
        %249 = sbr.rel (%p247) target = $region20
      $region19: #{iaff_forward.2} parent=11 // pred_region
        _
      $region20: #{iaff_forward.2} parent=11 // pred_fallthru
        _
      // Predicated region
      $region21: #{iaff_forward.2} parent=11 // pred_check
        %p250 = pneg %p147
      $region22: #{iaff_forward.2} parent=11 // pred_check_branch
        %252 = sbr.rel (%p250) target = $region24
      $region23: #{iaff_forward.2} parent=11 // pred_region
        _
      $region24: #{iaff_forward.2} parent=11 // pred_fallthru
        _
    $region12: #{iaff_forward.2} parent=5 // pred_fallthru
      _
    %p253 = scmp.lt.s32.totalorder %s16, 4
    // Predicated region
    $region25: #{iaff_forward.2} parent=5 // pred_check
      %p254 = pneg %p253
    $region26: #{iaff_forward.2} parent=5 // pred_check_branch
      %256 = sbr.rel (%p254) target = $region28
    $region27: #{iaff_forward.2} parent=5 // pred_region
      // Predicated region
      $region29: #{iaff_forward.2} parent=27 // pred_check
        %p257 = pneg %p50
      $region30: #{iaff_forward.2} parent=27 // pred_check_branch
        %259 = sbr.rel (%p257) target = $region32
      $region31: #{iaff_forward.2} parent=27 // pred_region
        %p260 = scmp.lt.s32.totalorder %s23, 1
        %s261 = scalar_select %p260, %s23, 1
        %p262 = scmp.lt.s32.totalorder %s24, 1
        %s263 = scalar_select %p262, %s24, 1
        %s264 = smul.addr %s261, 2
        %s265 = sadd.s32 %s263, %s264
        %s266 = smul.addr %s265, 4
        %s267 = scalar_lea.vmem %s0, %s266
      $region32: #{iaff_forward.2} parent=27 // pred_fallthru
        _
      // Predicated region
      $region33: #{iaff_forward.2} parent=27 // pred_check
        %p268 = pneg %p78
      $region34: #{iaff_forward.2} parent=27 // pred_check_branch
        %270 = sbr.rel (%p268) target = $region36
      $region35: #{iaff_forward.2} parent=27 // pred_region
        %p271 = scmp.lt.s32.totalorder %s23, 1
        %s272 = scalar_select %p271, %s23, 1
        %p273 = scmp.lt.s32.totalorder %s24, 1
        %s274 = scalar_select %p273, %s24, 1
        %s275 = smul.addr %s272, 2
        %s276 = sadd.s32 %s274, %s275
        %s277 = smul.addr %s276, 4
        %s278 = scalar_lea.vmem %s1, %s277
      $region36: #{iaff_forward.2} parent=27 // pred_fallthru
        _
      // Predicated region
      $region37: #{iaff_forward.2} parent=27 // pred_check
        %p279 = pneg %p167
      $region38: #{iaff_forward.2} parent=27 // pred_check_branch
        %281 = sbr.rel (%p279) target = $region40
      $region39: #{iaff_forward.2} parent=27 // pred_region
        %p282 = scmp.lt.s32.totalorder %s23, 1
        %s283 = scalar_select %p282, %s23, 1
        %s284 = smul.addr %s283, 4
        %s285 = scalar_lea.vmem %s5, %s284
      $region40: #{iaff_forward.2} parent=27 // pred_fallthru
        _
    $region28: #{iaff_forward.2} parent=5 // pred_fallthru
      _
    %p286 = scmp.le.s32.totalorder 1, %s16
    %p287 = scmp.lt.s32.totalorder %s16, 5
    %p288 = pnand %p286, %p287
    %p289 = pneg %p288
    // Predicated region
    $region41: #{iaff_forward.2} parent=5 // pred_check
      _
    $region42: #{iaff_forward.2} parent=5 // pred_check_branch
      %291 = sbr.rel (%p288) target = $region44
    $region43: #{iaff_forward.2} parent=5 // pred_region
      %s292 = ssub.s32 %s16, 1
      %p293 = scmp.lt.s32.totalorder %s25, 1
      %s294 = scalar_select %p293, %s25, 1
      %p295 = scmp.lt.s32.totalorder %s26, 1
      %s296 = scalar_select %p295, %s26, 1
      %s297 = smul.addr %s294, 2
      %s298 = sadd.s32 %s296, %s297
      %s299 = smul.addr %s298, 4
      %s300 = scalar_lea.vmem %s0, %s299
      %p301 = pneg %p56
      %p302 = pneg %p53
      %p303 = scmp.lt.s32.totalorder %s25, 1
      %s304 = scalar_select %p303, %s25, 1
      %p305 = scmp.lt.s32.totalorder %s26, 1
      %s306 = scalar_select %p305, %s26, 1
      %s307 = smul.addr %s304, 2
      %s308 = sadd.s32 %s306, %s307
      %s309 = smul.addr %s308, 4
      %s310 = scalar_lea.vmem %s1, %s309
      %p311 = pneg %p84
      %p312 = pneg %p81
      %p313 = pneg %p105
      %p314 = pneg %p102
      %p315 = pneg %p126
      %p316 = pneg %p123
      %p317 = pneg %p147
      %p318 = pneg %p144
      %p319 = scmp.lt.s32.totalorder %s25, 1
      %s320 = scalar_select %p319, %s25, 1
      %s321 = smul.addr %s320, 4
      %s322 = scalar_lea.vmem %s5, %s321
      %p323 = pneg %p173
      %p324 = pneg %p170
      %p325 = pneg %p201
      %p326 = pneg %p198
      %p327 = scmp.lt.s32.totalorder %s25, 1
      %s328 = scalar_select %p327, %s25, 1
      %p329 = scmp.lt.s32.totalorder %s26, 1
      %s330 = scalar_select %p329, %s26, 1
      %s331 = smul.addr %s328, 2
      %s332 = sadd.s32 %s330, %s331
      %s333 = smul.addr %s332, 4
      %s334 = scalar_lea.vmem %s6, %s333
      %p335 = pneg %p229
      %p336 = pneg %p226
      %p337 = scmp.lt.s32.totalorder %s25, 1
      %s338 = scalar_select %p337, %s25, 1
      %p339 = scmp.lt.s32.totalorder %s26, 1
      %s340 = scalar_select %p339, %s26, 1
      %s341 = smul.addr %s338, 2
      %s342 = sadd.s32 %s340, %s341
      %s343 = smul.addr %s342, 4
      %s344 = scalar_lea.vmem %s7, %s343
      %p345 = scmp.lt.s32.totalorder %s25, 1
      %s346 = scalar_select %p345, %s25, 1
      %p347 = scmp.lt.s32.totalorder %s26, 1
      %s348 = scalar_select %p347, %s26, 1
      %s349 = smul.addr %s346, 2
      %s350 = sadd.s32 %s348, %s349
      %s351 = smul.addr %s350, 4
      %s352 = scalar_lea.vmem %s0, %s351
      %p353 = scmp.lt.s32.totalorder %s25, 1
      %s354 = scalar_select %p353, %s25, 1
      %p355 = scmp.lt.s32.totalorder %s26, 1
      %s356 = scalar_select %p355, %s26, 1
      %s357 = smul.addr %s354, 2
      %s358 = sadd.s32 %s356, %s357
      %s359 = smul.addr %s358, 4
      %s360 = scalar_lea.vmem %s1, %s359
      %p361 = scmp.lt.s32.totalorder %s25, 1
      %s362 = scalar_select %p361, %s25, 1
      %s363 = smul.addr %s362, 4
      %s364 = scalar_lea.vmem %s5, %s363
      %p365 = scmp.lt.s32.totalorder %s25, 1
      %s366 = scalar_select %p365, %s25, 1
      %p367 = scmp.lt.s32.totalorder %s26, 1
      %s368 = scalar_select %p367, %s26, 1
      %s369 = smul.addr %s366, 2
      %s370 = sadd.s32 %s368, %s369
      %s371 = smul.addr %s370, 4
      %s372 = scalar_lea.vmem %s6, %s371
      %p373 = scmp.lt.s32.totalorder %s25, 1
      %s374 = scalar_select %p373, %s25, 1
      %p375 = scmp.lt.s32.totalorder %s26, 1
      %s376 = scalar_select %p375, %s26, 1
      %s377 = smul.addr %s374, 2
      %s378 = sadd.s32 %s376, %s377
      %s379 = smul.addr %s378, 4
      %s380 = scalar_lea.vmem %s7, %s379
      %v381 = vld [vmem:[%s352] sm:$0xf]
      %v382 = vld [vmem:[%s360] sm:$0xf]
      %v383 = vadd.f32 %v381, %v382
      %v384 = vld [vmem:[%s2] sm:$0x1]
      %v385 = vld [vmem:[#allocation2] sm:$0x1]
      %v386 = vld [vmem:[%s4] sm:$0xf]
      %v387 = vld [vmem:[%s364] sm:$0xf]
      %389 = vset.pattern.permute.xlu0 0
      %390 = vperm.xlu0 %389, %v384
      %v391 = vpop.permute.xlu0 %390
      %v393 = vperm.slane %v391, 0
      %v394 = vmul.f32 %v393, %v383
      %395 = vset.pattern.permute.xlu0 1
      %396 = vperm.xlu0 %395, %v384
      %v397 = vpop.permute.xlu0 %396
      %v399 = vperm.slane %v397, 0
      %v400 = vmul.f32 %v399, %v383
      %v402 = vrot.slane %v400, 1
      %v404 = vadd.f32 %v394, %v402
      %405 = vset.pattern.permute.xlu0 2
      %406 = vperm.xlu0 %405, %v384
      %v407 = vpop.permute.xlu0 %406
      %v409 = vperm.slane %v407, 0
      %v410 = vmul.f32 %v409, %v383
      %v412 = vrot.slane %v410, 2
      %v414 = vadd.f32 %v404, %v412
      %415 = vset.pattern.permute.xlu0 3
      %416 = vperm.xlu0 %415, %v384
      %v417 = vpop.permute.xlu0 %416
      %v419 = vperm.slane %v417, 0
      %v420 = vmul.f32 %v419, %v383
      %v422 = vrot.slane %v420, 3
      %v424 = vadd.f32 %v414, %v422
      %426 = vset.pattern.permute.xlu0 0
      %427 = vperm.xlu0 %426, %v385
      %v428 = vpop.permute.xlu0 %427
      %v430 = vperm.slane %v428, 0
      %v431 = vadd.f32 %v424, %v430
      %v432 = vmax.f32 %v431, 0.0
      %434 = vset.pattern.permute.xlu0 0
      %435 = vperm.xlu0 %434, %v386
      %v436 = vpop.permute.xlu0 %435
      %v438 = vperm.slane %v432, 0
      %v439 = vmul.f32 %v436, %v438
      %441 = vset.pattern.permute.xlu0 0
      %442 = vperm.xlu0 %441, %v387
      %v443 = vpop.permute.xlu0 %442
      %v445 = vadd.f32 %v439, %v443
      %v446 = vxor.u32 %v445, 2147483648
      %v447 = vmul.f32 %v446, 1.442695
      %v448 = vpow.pop %v447
      %v449 = vadd.f32 %v448, 1.0
      %v450 = vrcp.pop %v449
      %v451 = vmul.f32 %v449, %v450
      %v452 = vsub.f32 1.0, %v451
      %v453 = vmul.f32 %v450, %v452
      %v454 = vadd.f32 %v450, %v453
      %vm455 = vweird.f32 %v449
      %vm456 = vweird.f32 %v450
      %vm457 = vmor %vm455, %vm456
      %v458 = vsel %vm457, %v450, %v454
      %v459 = vand.u32 2147483647, %v449
      %vm460 = vcmp.eq.f32.partialorder %v459, 8.507059e+37
      %v461 = vand.u32 %v449, 2147483648
      %v462 = vor.u32 1.1754944e-38, %v461
      %v463 = vsel %vm460, %v462, %v458
      %v464 = vmul.f32 1.0, %v463
      %v465 = vsub.f32 %v381, %v382
      %v466 = vmul.f32 %v464, %v465
      %v467 = vadd.f32 %v382, %v466
      %468 = vst [vmem:[%s372] sm:$0xf] %v467
      %vm469 = vcmask 1043456
      %v470 = vsel %vm469, %v467, 0.0
      %471 = vadd.xlane.f32.xlu0 %v470
      %v472 = vpop.xlane.xlu0 %471
      %473 = vst [vmem:[%s380] sm:$0xf] %v472
      %p474 = scmp.lt.s32.totalorder %s25, 1
      %s475 = scalar_select %p474, %s25, 1
      %p476 = scmp.lt.s32.totalorder %s26, 1
      %s477 = scalar_select %p476, %s26, 1
      %s478 = smul.addr %s475, 2
      %s479 = sadd.s32 %s477, %s478
      %s480 = smul.addr %s479, 4
      %s481 = scalar_lea.vmem %s6, %s480
      %p482 = scmp.lt.s32.totalorder %s25, 1
      %s483 = scalar_select %p482, %s25, 1
      %p484 = scmp.lt.s32.totalorder %s26, 1
      %s485 = scalar_select %p484, %s26, 1
      %s486 = smul.addr %s483, 2
      %s487 = sadd.s32 %s485, %s486
      %s488 = smul.addr %s487, 4
      %s489 = scalar_lea.vmem %s7, %s488
      // Predicated region
      $region45: #{iaff_forward.2} parent=43 // pred_check
        %p490 = pneg %p198
      $region46: #{iaff_forward.2} parent=43 // pred_check_branch
        %492 = sbr.rel (%p490) target = $region48
      $region47: #{iaff_forward.2} parent=43 // pred_region
        _
      $region48: #{iaff_forward.2} parent=43 // pred_fallthru
        _
      // Predicated region
      $region49: #{iaff_forward.2} parent=43 // pred_check
        %p493 = pneg %p226
      $region50: #{iaff_forward.2} parent=43 // pred_check_branch
        %495 = sbr.rel (%p493) target = $region52
      $region51: #{iaff_forward.2} parent=43 // pred_region
        _
      $region52: #{iaff_forward.2} parent=43 // pred_fallthru
        _
    $region44: #{iaff_forward.2} parent=5 // pred_fallthru
      _
    %p496 = scmp.le.s32.totalorder 2, %s16
    // Predicated region
    $region53: #{iaff_forward.2} parent=5 // pred_check
      %p497 = pneg %p496
    $region54: #{iaff_forward.2} parent=5 // pred_check_branch
      %499 = sbr.rel (%p497) target = $region56
    $region55: #{iaff_forward.2} parent=5 // pred_region
      %s500 = ssub.s32 %s16, 2
      // Predicated region
      $region57: #{iaff_forward.2} parent=55 // pred_check
        %p501 = pneg %p204
      $region58: #{iaff_forward.2} parent=55 // pred_check_branch
        %503 = sbr.rel (%p501) target = $region60
      $region59: #{iaff_forward.2} parent=55 // pred_region
        %p504 = scmp.lt.s32.totalorder %s27, 1
        %s505 = scalar_select %p504, %s27, 1
        %p506 = scmp.lt.s32.totalorder %s28, 1
        %s507 = scalar_select %p506, %s28, 1
        %s508 = smul.addr %s505, 2
        %s509 = sadd.s32 %s507, %s508
        %s510 = smul.addr %s509, 4
        %s511 = scalar_lea.vmem %s6, %s510
      $region60: #{iaff_forward.2} parent=55 // pred_fallthru
        _
      // Predicated region
      $region61: #{iaff_forward.2} parent=55 // pred_check
        %p512 = pneg %p232
      $region62: #{iaff_forward.2} parent=55 // pred_check_branch
        %514 = sbr.rel (%p512) target = $region64
      $region63: #{iaff_forward.2} parent=55 // pred_region
        %p515 = scmp.lt.s32.totalorder %s27, 1
        %s516 = scalar_select %p515, %s27, 1
        %p517 = scmp.lt.s32.totalorder %s28, 1
        %s518 = scalar_select %p517, %s28, 1
        %s519 = smul.addr %s516, 2
        %s520 = sadd.s32 %s518, %s519
        %s521 = smul.addr %s520, 4
        %s522 = scalar_lea.vmem %s7, %s521
      $region64: #{iaff_forward.2} parent=55 // pred_fallthru
        _
    $region56: #{iaff_forward.2} parent=5 // pred_fallthru
      _
  $region6: #{iaff_forward.2} parent=0 // loop_footer
    %s20 = sadd.s32 1, %s16
  $region7: #{iaff_forward.2} parent=0 // loop_footer_branch
    %15 = sbr.rel target = $region3
  $region8: #{iaff_forward.2} parent=0 // loop_exit
    _

</llo_original>
